<compile_context>
chip_gen: v5e
topology: v5e:2x2
jax: 0.10.0
libtpu: 0.0.40
codegen_flags: <defaults>
</compile_context>

<pallas_src>
import jax
import jax.numpy as jnp
from jax.experimental import pallas as pl
from jax.experimental.pallas import tpu as pltpu

LANES = 128
SUBLANES = 8  # f32 accumulator sublane count


def _round_up(x, n):
    return ((x + n - 1) // n) * n


def _cdiv(a, b):
    return (a + b - 1) // b


def _chip_config():
    """Trace-time per-generation defaults: (is_v7x, f32 rows per block)."""
    try:
        kind = jax.devices()[0].device_kind.lower()
    except Exception:
        kind = ""
    is_v7x = ("v7" in kind) or ("7x" in kind)
    if is_v7x or ("v6" in kind):
        tm_rows_f32 = 8192   # 4 MiB/block f32; 16 MiB double-buffered (2 inputs)
    else:
        tm_rows_f32 = 4096   # v5e / unknown: 8 MiB double-buffered, safe at 16 MiB scoped
    return is_v7x, tm_rows_f32


def _make_kernel(tm_eff, steps, nrows, needs_mask):
    def kernel(p_ref, a_ref, o_ref):
        # Grid = (slice, step); output block depends only on `slice`, so it
        # stays resident in VMEM across the sequential step axis.
        s = pl.program_id(1)

        p = p_ref[...].astype(jnp.float32)
        a = a_ref[...].astype(jnp.float32)

        # log(p+1) - log(a+1) == log1p((p - a) / (a + 1)).
        # NOTE: the divide also lowers to an EUP reciprocal (this does not
        # "halve" EUP work); kernel is HBM-bound, so this is not on the
        # critical path.  Contingency if EUP ever binds:
        #   d = jnp.log1p((p - a) * pl.reciprocal(a + 1.0, approx=True))
        d = jnp.log1p((p - a) / (a + 1.0))
        sq = d * d

        if needs_mask:
            # Mask rows past the real row count (ragged last tile / clamped
            # overshoot tiles).  jnp.where selects, so garbage in masked
            # rows can never poison the sum.
            row0 = (pl.program_id(0) * steps + s) * tm_eff
            rid = row0 + jax.lax.broadcasted_iota(jnp.int32, (tm_eff, 1), 0)
            sq = jnp.where(rid < nrows, sq, 0.0)

        # Fold (tm_eff, 128) into an (8, 128) lane-wise partial sum with plain
        # VPU vreg adds (no cross-lane XLU reduce in the hot loop).
        part = sq.reshape(tm_eff // SUBLANES, SUBLANES, LANES).sum(axis=0)

        @pl.when(s == 0)
        def _():
            o_ref[...] = part

        @pl.when(s != 0)
        def _():
            o_ref[...] += part

    return kernel


def rmsle_loss(pred, actual, *, tm=None, num_slices=None):
    """RMSLE over all elements of pred/actual (same shape). Returns f32 scalar."""
    assert pred.shape == actual.shape
    total = pred.size
    assert total > 0

    is_v7x, tm_rows_f32 = _chip_config()

    def _prep(x):
        if x.dtype.itemsize > 4:          # TPU vector units are 32-bit
            x = x.astype(jnp.float32)
        return x.reshape(-1)

    flat_p = _prep(pred)
    flat_a = _prep(actual)

    itemsize = min(flat_p.dtype.itemsize, flat_a.dtype.itemsize)
    pack = max(SUBLANES, 32 // itemsize)   # sublane packing: 8 f32, 16 bf16, 32 int8/fp8

    # ---- rows of 128 lanes (all trace-time Python ints) -------------------
    m = _cdiv(total, LANES)
    pad_elems = m * LANES - total
    if m < pack:                           # guarantee one legal (pack, 128) tile
        pad_elems += (pack - m) * LANES
        m = pack
    if pad_elems:
        # Rare: only when total isn't a multiple of 128 (or is tiny).  Padding
        # zeros contribute log1p(0/1) = 0; the divisor stays `total`.
        flat_p = jnp.concatenate([flat_p, jnp.zeros((pad_elems,), flat_p.dtype)])
        flat_a = jnp.concatenate([flat_a, jnp.zeros((pad_elems,), flat_a.dtype)])
    # Common case: contiguous reshape, no HBM copy.
    p2 = flat_p.reshape(m, LANES)
    a2 = flat_a.reshape(m, LANES)

    # ---- tiling ------------------------------------------------------------
    if num_slices is None:
        # 2 slices only where 2 TensorCores exist (v7x); 1 on v5e/v6e.
        num_slices = 2 if (is_v7x and m >= 2 * pack) else 1
    if tm is None:
        tm = tm_rows_f32 * (4 // itemsize)   # keep bytes per block constant across dtypes

    rows_per_slice = _round_up(_cdiv(m, num_slices), pack)
    tm_eff = max(pack, min(_round_up(tm, pack), rows_per_slice))
    steps = _cdiv(rows_per_slice, tm_eff)

    coverage = num_slices * steps * tm_eff
    needs_mask = coverage != m
    last_block = (m - 1) // tm_eff
    if needs_mask:
        # Clamp overshoot tiles onto the last valid tile (their contribution is
        # fully masked inside the kernel) so no DMA ever starts past the array.
        idx_map = lambda c, s: (jnp.minimum(c * steps + s, last_block), 0)
    else:
        idx_map = lambda c, s: (c * steps + s, 0)

    kernel = _make_kernel(tm_eff, steps, m, needs_mask)

    cost = pl.CostEstimate(
        flops=5 * total,
        transcendentals=2 * total,
        bytes_accessed=(p2.size * p2.dtype.itemsize
                        + a2.size * a2.dtype.itemsize
                        + num_slices * SUBLANES * LANES * 4),
    )

    slice_sem = (getattr(pltpu, "CORE_PARALLEL", pltpu.PARALLEL)
                 if num_slices > 1 else pltpu.PARALLEL)

    partials = pl.pallas_call(
        kernel,
        out_shape=jax.ShapeDtypeStruct((num_slices, SUBLANES, LANES), jnp.float32),
        grid_spec=pltpu.PrefetchScalarGridSpec(
            num_scalar_prefetch=0,
            grid=(num_slices, steps),
            in_specs=[
                pl.BlockSpec((tm_eff, LANES), idx_map),
                pl.BlockSpec((tm_eff, LANES), idx_map),
            ],
            # Leading dim squeezed: kernel sees a plain (8, 128) accumulator.
            out_specs=pl.BlockSpec((None, SUBLANES, LANES), lambda c, s: (c, 0, 0)),
        ),
        compiler_params=pltpu.CompilerParams(
            dimension_semantics=(slice_sem, pltpu.ARBITRARY),
        ),
        cost_estimate=cost,
    )(p2, a2)

    # Tiny finalize (glue): combine per-slice lane-wise partial sums.
    return jnp.sqrt(jnp.sum(partials) / jnp.float32(total))


if __name__ == "__main__":
    key = jax.random.PRNGKey(0)
    kp, ka = jax.random.split(key)
    # NCHW inputs, small shapes: batch=2, channels=4, spatial=16x16.
    shape = (2, 4, 16, 16)
    # RMSLE requires pred+1 > 0 and actual+1 > 0; use non-negative inputs.
    pred = jax.random.uniform(kp, shape, dtype=jnp.float32, minval=0.0, maxval=10.0)
    actual = jax.random.uniform(ka, shape, dtype=jnp.float32, minval=0.0, maxval=10.0)

    loss = rmsle_loss(pred, actual)
    loss = jax.block_until_ready(loss)

    # Reference check in plain JAX (same form as the PyTorch module).
    ref = jnp.sqrt(jnp.mean((jnp.log(pred + 1.0) - jnp.log(actual + 1.0)) ** 2))
    assert jnp.allclose(loss, ref, rtol=1e-5, atol=1e-6), (loss, ref)

    print("KERNEL_OK")
</pallas_src>

<mosaic_0001>
module attributes {stable_mosaic.version = 11 : i64} {
  func.func @kernel(%arg0: i32, %arg1: i32, %arg2: memref<16x128xf32, #tpu.memory_space<vmem>>, %arg3: memref<16x128xf32, #tpu.memory_space<vmem>>, %arg4: memref<1x8x128xf32, #tpu.memory_space<vmem>>) attributes {dimension_semantics = [#tpu.dimension_semantics<parallel>, #tpu.dimension_semantics<arbitrary>], iteration_bounds = array<i64: 1, 1>, scalar_prefetch = 0 : i64, scratch_operands = 0 : i64, tpu.core_type = #tpu.core_type<tc>, window_params = [{transform_indices = @transform_0, window_bounds = array<i64: 16, 128>}, {transform_indices = @transform_1, window_bounds = array<i64: 16, 128>}, {transform_indices = @transform_2, window_bounds = array<i64: 1, 8, 128>}]} {
    %c0 = arith.constant 0 : index
    %c0_0 = arith.constant 0 : index
    %0 = vector.load %arg2[%c0, %c0_0] : memref<16x128xf32, #tpu.memory_space<vmem>>, vector<16x128xf32>
    %c0_1 = arith.constant 0 : index
    %c0_2 = arith.constant 0 : index
    %1 = vector.load %arg3[%c0_1, %c0_2] : memref<16x128xf32, #tpu.memory_space<vmem>>, vector<16x128xf32>
    %2 = arith.subf %0, %1 : vector<16x128xf32>
    %cst = arith.constant 1.000000e+00 : f32
    %3 = vector.broadcast %cst : f32 to vector<16x128xf32>
    %4 = arith.addf %1, %3 : vector<16x128xf32>
    %5 = arith.divf %2, %4 : vector<16x128xf32>
    %6 = math.log1p %5 : vector<16x128xf32>
    %7 = arith.mulf %6, %6 : vector<16x128xf32>
    %8 = vector.shape_cast %7 : vector<16x128xf32> to vector<2x8x128xf32>
    %cst_3 = arith.constant dense<0.000000e+00> : vector<8x128xf32>
    %9 = vector.multi_reduction <add>, %8, %cst_3 [0] : vector<2x8x128xf32> to vector<8x128xf32>
    %c0_i32 = arith.constant 0 : i32
    %10 = arith.cmpi eq, %arg1, %c0_i32 : i32
    %11 = arith.extui %10 : i1 to i32
    %c0_i32_4 = arith.constant 0 : i32
    %12 = arith.cmpi ne, %11, %c0_i32_4 : i32
    scf.if %12 {
      %c0_7 = arith.constant 0 : index
      %c0_8 = arith.constant 0 : index
      %c0_9 = arith.constant 0 : index
      %16 = vector.load %arg4[%c0_7, %c0_8, %c0_9] : memref<1x8x128xf32, #tpu.memory_space<vmem>>, vector<1x8x128xf32>
      %17 = vector.shape_cast %16 : vector<1x8x128xf32> to vector<8x128xf32>
      %18 = vector.shape_cast %9 : vector<8x128xf32> to vector<1x8x128xf32>
      tpu.vector_store %arg4[%c0_7, %c0_8, %c0_9], %18 {strides = array<i32>} : memref<1x8x128xf32, #tpu.memory_space<vmem>>, vector<1x8x128xf32>,
    } else {
    }
    %c0_i32_5 = arith.constant 0 : i32
    %13 = arith.cmpi ne, %arg1, %c0_i32_5 : i32
    %14 = arith.extui %13 : i1 to i32
    %c0_i32_6 = arith.constant 0 : i32
    %15 = arith.cmpi ne, %14, %c0_i32_6 : i32
    scf.if %15 {
      %c0_7 = arith.constant 0 : index
      %c0_8 = arith.constant 0 : index
      %c0_9 = arith.constant 0 : index
      %16 = vector.load %arg4[%c0_7, %c0_8, %c0_9] : memref<1x8x128xf32, #tpu.memory_space<vmem>>, vector<1x8x128xf32>
      %17 = vector.shape_cast %16 : vector<1x8x128xf32> to vector<8x128xf32>
      %18 = arith.addf %17, %9 : vector<8x128xf32>
      %c0_10 = arith.constant 0 : index
      %c0_11 = arith.constant 0 : index
      %c0_12 = arith.constant 0 : index
      %19 = vector.load %arg4[%c0_10, %c0_11, %c0_12] : memref<1x8x128xf32, #tpu.memory_space<vmem>>, vector<1x8x128xf32>
      %20 = vector.shape_cast %19 : vector<1x8x128xf32> to vector<8x128xf32>
      %21 = vector.shape_cast %18 : vector<8x128xf32> to vector<1x8x128xf32>
      tpu.vector_store %arg4[%c0_10, %c0_11, %c0_12], %21 {strides = array<i32>} : memref<1x8x128xf32, #tpu.memory_space<vmem>>, vector<1x8x128xf32>,
    } else {
    }
    return
  }
  func.func @transform_0(%arg0: i32, %arg1: i32) -> (i32, i32) {
    %c1_i32 = arith.constant 1 : i32
    %0 = arith.muli %arg0, %c1_i32 : i32
    %1 = arith.addi %0, %arg1 : i32
    %c0_i32 = arith.constant 0 : i32
    %c0_i32_0 = arith.constant 0 : i32
    return %1, %c0_i32 : i32, i32
  }
  func.func @transform_1(%arg0: i32, %arg1: i32) -> (i32, i32) {
    %c1_i32 = arith.constant 1 : i32
    %0 = arith.muli %arg0, %c1_i32 : i32
    %1 = arith.addi %0, %arg1 : i32
    %c0_i32 = arith.constant 0 : i32
    %c0_i32_0 = arith.constant 0 : i32
    return %1, %c0_i32 : i32, i32
  }
  func.func @transform_2(%arg0: i32, %arg1: i32) -> (i32, i32, i32) {
    %c0_i32 = arith.constant 0 : i32
    %c0_i32_0 = arith.constant 0 : i32
    %c0_i32_1 = arith.constant 0 : i32
    return %arg0, %c0_i32, %c0_i32_0 : i32, i32, i32
  }
}

</mosaic_0001>

<llo_original>
// kernel: tpu_custom_call.1
$region0: #{tpu_custom_call.1}
  #allocation0 [shape = 'u32[]', space=smem, size = 0x4, offset = 0x4, fixed_abs, tag = 'smem constant byte address 0x4 - core index']
  #allocation1 [shape = 'u32[72,128]{1,0:T(1,128)}', space=vmem, size = 0x9000, scoped, tag = 'internal scratch']
  %s0 = inlined_call_operand.hbm [shape: f32[16,128], index: 0, kind: input, shape index: {}]
  %s1 = inlined_call_operand.hbm [shape: f32[16,128], index: 1, kind: input, shape index: {}]
  %s2 = inlined_call_operand.hbm [shape: f32[1,8,128], index: 2, kind: output, shape index: {}]
  %s3 = sld [smem:[#allocation0]]
  $region34: #{tpu_custom_call.1} parent=0
    _
  %s5 = ssub.s32 1, %s3
  %s6 = scalar_select 0, %s5, %s3
  $region1: #{tpu_custom_call.1} parent=0
    #allocation2 [shape = 'u8[8192]{0}', space=vmem, size = 0x2000, scoped, tag = 'input window, operand 0, single buffered']
    #allocation3 [shape = 's32[1]{0}', space=sflag, size = 0x4, scoped, tag = 'scoped memory for tpu_custom_call.1']
    #allocation4 [shape = 's32[1]{0}', space=sflag, size = 0x4, scoped, tag = 'scoped memory for tpu_custom_call.1']
    #allocation5 [shape = 'u8[8192]{0}', space=vmem, size = 0x2000, scoped, tag = 'input window, operand 1, single buffered']
    #allocation6 [shape = 's32[1]{0}', space=sflag, size = 0x4, scoped, tag = 'scoped memory for tpu_custom_call.1']
    #allocation7 [shape = 'u8[4096]{0}', space=vmem, size = 0x1000, scoped, tag = 'output window, operand 0, single buffered']
    %7 = vsyncpa [#allocation3], 0
    %8 = vsyncpa [#allocation6], 0
    %9 = vsyncpa [#allocation4], 0
    // Predicated region
    $region2: #{tpu_custom_call.1} parent=1 // pred_check
      _
    $region3: #{tpu_custom_call.1} parent=1 // pred_check_branch
      %11 = sbr.rel (0) target = $region5
    $region4: #{tpu_custom_call.1} parent=1 // pred_region
      %s12 = sadd.s32 0, 0
      %s13 = smul.u32 2, %s12
      %15 = vsyncadd [#allocation3], 0
      %s16 = smul.addr %s13, 8
      %s17 = scalar_lea.hbm %s0, %s16
      %s18 = sshll.u32 %s17, 4
      %s19 = int_to_ptr.hbm [resolvable:$true] %s18
      %s20 = sshll.u32 [#allocation2], 4
      %s21 = int_to_ptr.vmem [resolvable:$true] %s20
      %26 = dma.hbm_to_vmem [thread:$0]  %s19, 256, %s21, [#allocation3], 128, 128, 8
    $region5: #{tpu_custom_call.1} parent=1 // pred_fallthru
      _
    // Predicated region
    $region6: #{tpu_custom_call.1} parent=1 // pred_check
      _
    $region7: #{tpu_custom_call.1} parent=1 // pred_check_branch
      %28 = sbr.rel (0) target = $region9
    $region8: #{tpu_custom_call.1} parent=1 // pred_region
      %s29 = sadd.s32 0, 0
      %s30 = smul.u32 2, %s29
      %32 = vsyncadd [#allocation6], 0
      %s33 = smul.addr %s30, 8
      %s34 = scalar_lea.hbm %s1, %s33
      %s35 = sshll.u32 %s34, 4
      %s36 = int_to_ptr.hbm [resolvable:$true] %s35
      %s37 = sshll.u32 [#allocation5], 4
      %s38 = int_to_ptr.vmem [resolvable:$true] %s37
      %43 = dma.hbm_to_vmem [thread:$0]  %s36, 256, %s38, [#allocation6], 128, 128, 8
    $region9: #{tpu_custom_call.1} parent=1 // pred_fallthru
      _
    // Predicated region
    $region10: #{tpu_custom_call.1} parent=1 // pred_check
      _
    $region11: #{tpu_custom_call.1} parent=1 // pred_check_branch
      %45 = sbr.rel (0) target = $region13
    $region12: #{tpu_custom_call.1} parent=1 // pred_region
      %47 = dma.done [#allocation3], 256
    $region13: #{tpu_custom_call.1} parent=1 // pred_fallthru
      _
    // Predicated region
    $region14: #{tpu_custom_call.1} parent=1 // pred_check
      _
    $region15: #{tpu_custom_call.1} parent=1 // pred_check_branch
      %49 = sbr.rel (0) target = $region17
    $region16: #{tpu_custom_call.1} parent=1 // pred_region
      %51 = dma.done [#allocation6], 256
    $region17: #{tpu_custom_call.1} parent=1 // pred_fallthru
      _
    %s52 = sadd.s32 0, 0
    %s53 = smul.u32 2, %s52
    %s54 = sadd.s32 0, 0
    %s55 = smul.u32 2, %s54
    %v56 = vld [vmem:[#allocation2] sm:$0xff]
    %v57 = vld [vmem:[#allocation2 + $0x8] sm:$0xff]
    %v58 = vld [vmem:[#allocation5] sm:$0xff]
    %v59 = vld [vmem:[#allocation5 + $0x8] sm:$0xff]
    %v60 = vsub.f32 %v56, %v58
    %v61 = vsub.f32 %v57, %v59
    %v62 = vadd.f32 %v58, 1.0
    %v63 = vadd.f32 %v59, 1.0
    %v64 = vrcp.pop %v62
    %v65 = vmul.f32 %v62, %v64
    %v66 = vsub.f32 1.0, %v65
    %v67 = vmul.f32 %v64, %v66
    %v68 = vadd.f32 %v64, %v67
    %vm69 = vweird.f32 %v62
    %vm70 = vweird.f32 %v64
    %vm71 = vmor %vm69, %vm70
    %v72 = vsel %vm71, %v64, %v68
    %v73 = vand.u32 2147483647, %v62
    %vm74 = vcmp.eq.f32.partialorder %v73, 8.507059e+37
    %v75 = vand.u32 %v62, 2147483648
    %v76 = vor.u32 1.1754944e-38, %v75
    %v77 = vsel %vm74, %v76, %v72
    %v78 = vmul.f32 %v60, %v77
    %v79 = vrcp.pop %v63
    %v80 = vmul.f32 %v63, %v79
    %v81 = vsub.f32 1.0, %v80
    %v82 = vmul.f32 %v79, %v81
    %v83 = vadd.f32 %v79, %v82
    %vm84 = vweird.f32 %v63
    %vm85 = vweird.f32 %v79
    %vm86 = vmor %vm84, %vm85
    %v87 = vsel %vm86, %v79, %v83
    %v88 = vand.u32 2147483647, %v63
    %vm89 = vcmp.eq.f32.partialorder %v88, 8.507059e+37
    %v90 = vand.u32 %v63, 2147483648
    %v91 = vor.u32 1.1754944e-38, %v90
    %v92 = vsel %vm89, %v91, %v87
    %v93 = vmul.f32 %v61, %v92
    %v94 = vadd.f32 %v78, 1.0
    %v95 = vlog2.pop %v94
    %v96 = vmul.f32 %v95, 0.6931472
    %v97 = vmul.f32 -0.5, %v78
    %v98 = vadd.f32 %v97, 1.0
    %v99 = vmul.f32 %v98, %v78
    %v100 = vand.u32 2147483647, %v78
    %vm101 = vcmp.lt.f32.partialorder %v100, 0.0004427343
    %v102 = vsel %vm101, %v99, %v96
    %v103 = vadd.f32 %v93, 1.0
    %v104 = vlog2.pop %v103
    %v105 = vmul.f32 %v104, 0.6931472
    %v106 = vmul.f32 -0.5, %v93
    %v107 = vadd.f32 %v106, 1.0
    %v108 = vmul.f32 %v107, %v93
    %v109 = vand.u32 2147483647, %v93
    %vm110 = vcmp.lt.f32.partialorder %v109, 0.0004427343
    %v111 = vsel %vm110, %v108, %v105
    %v112 = vmul.f32 %v102, %v102
    %v113 = vmul.f32 %v111, %v111
    %v114 = vadd.f32 %v112, %v113
    %p115 = scmp.eq.s32.totalorder 0, 0
    // Predicated region
    $region18: #{tpu_custom_call.1} parent=1 // pred_check
      %p116 = pneg %p115
    $region19: #{tpu_custom_call.1} parent=1 // pred_check_branch
      %118 = sbr.rel (%p116) target = $region21
    $region20: #{tpu_custom_call.1} parent=1 // pred_region
      %119 = vst [vmem:[#allocation7] sm:$0xff] %v114
    $region21: #{tpu_custom_call.1} parent=1 // pred_fallthru
      _
    %p120 = scmp.ne.s32.totalorder 0, 0
    // Predicated region
    $region22: #{tpu_custom_call.1} parent=1 // pred_check
      %p121 = pneg %p120
    $region23: #{tpu_custom_call.1} parent=1 // pred_check_branch
      %123 = sbr.rel (%p121) target = $region25
    $region24: #{tpu_custom_call.1} parent=1 // pred_region
      %v124 = vld [vmem:[#allocation7] sm:$0xff]
      %v125 = vadd.f32 %v124, %v114
      %126 = vst [vmem:[#allocation7] sm:$0xff] %v125
    $region25: #{tpu_custom_call.1} parent=1 // pred_fallthru
      _
    // Predicated region
    $region26: #{tpu_custom_call.1} parent=1 // pred_check
      _
    $region27: #{tpu_custom_call.1} parent=1 // pred_check_branch
      %128 = sbr.rel (0) target = $region29
    $region28: #{tpu_custom_call.1} parent=1 // pred_region
      %130 = vsyncadd [#allocation4], 0
      %s132 = sshll.u32 [#allocation7], 4
      %s133 = int_to_ptr.vmem [resolvable:$true] %s132
      %s134 = sshll.u32 %s2, 4
      %s135 = int_to_ptr.hbm [resolvable:$true] %s134
      %137 = dma.vmem_to_hbm [thread:$0]  %s133, 128, %s135, [#allocation4]
    $region29: #{tpu_custom_call.1} parent=1 // pred_fallthru
      _
    // Predicated region
    $region30: #{tpu_custom_call.1} parent=1 // pred_check
      _
    $region31: #{tpu_custom_call.1} parent=1 // pred_check_branch
      %139 = sbr.rel (0) target = $region33
    $region32: #{tpu_custom_call.1} parent=1 // pred_region
      %141 = dma.done [#allocation4], 128
    $region33: #{tpu_custom_call.1} parent=1 // pred_fallthru
      _
    %142 = vsyncpa [#allocation3], 1
    %143 = vsyncpa [#allocation6], 1
    %144 = vsyncpa [#allocation4], 1

</llo_original>
